<compile_context>
chip_gen: v5e
topology: v5e:2x2
jax: 0.10.0
libtpu: 0.0.40
codegen_flags: <defaults>
</compile_context>

<pallas_src>
import math
from functools import partial

import jax
import jax.numpy as jnp
from jax.experimental import pallas as pl
from jax.experimental.pallas import tpu as pltpu


def _round_up(x, m):
    return ((x + m - 1) // m) * m


# ----------------------------- Pallas kernel -------------------------------

def _matmul_bias_kernel(a_ref, w_ref, b_ref, o_ref, acc_ref):
    # a_ref: (TM, TK) patch tile, w_ref: (TK, Coutp), b_ref: (1, Coutp)
    # acc_ref: (TM, Coutp) f32 accumulator, persistent across the K grid axis.
    k = pl.program_id(1)

    @pl.when(k == 0)
    def _():
        acc_ref[...] = jnp.zeros_like(acc_ref)

    acc_ref[...] += jnp.dot(a_ref[...], w_ref[...],
                            preferred_element_type=jnp.float32)

    @pl.when(k == pl.num_programs(1) - 1)
    def _():
        o_ref[...] = (acc_ref[...] + b_ref[...]).astype(o_ref.dtype)


def _im2col_matmul(patches, w_mat, bias, *, tm_max=512, tk_max=512):
    """patches: (M, K) f32, w_mat: (K, Cout) f32, bias: (Cout,) f32.

    Returns (M, Cout) f32 = patches @ w_mat + bias, computed on the MXU with
    lane-dense (128-multiple) K / Cout tiles.
    """
    M, K = patches.shape
    cout = w_mat.shape[1]

    # Lane/MXU-friendly padding: K and Cout padded to multiples of 128.
    # Zero padding contributes 0 to the dot / bias, so results are exact.
    coutp = _round_up(cout, 128)
    k128 = _round_up(K, 128)
    tk = k128 if k128 <= tk_max else tk_max
    kp = _round_up(K, tk)

    tm = min(tm_max, _round_up(M, 8))
    m_pad = _round_up(M, tm)

    patches_p = jnp.zeros((m_pad, kp), patches.dtype).at[:M, :K].set(patches)
    w_p = jnp.zeros((kp, coutp), w_mat.dtype).at[:K, :cout].set(w_mat)
    b_p = jnp.zeros((1, coutp), bias.dtype).at[0, :cout].set(bias)

    grid = (m_pad // tm, kp // tk)

    cost = pl.CostEstimate(
        flops=2 * m_pad * kp * coutp,
        transcendentals=0,
        bytes_accessed=4 * (m_pad * kp + kp * coutp + coutp + m_pad * coutp),
    )

    # Double-buffered patch/weight/out tiles + accumulator + bias, with 2x
    # headroom, clamped to <= 32 MiB (safe on v5e/v6e/v7x scoped VMEM).
    vmem_bytes = 4 * (2 * tm * tk + 2 * tk * coutp + 3 * tm * coutp + 2 * coutp)
    vmem_limit = int(min(max(2 * vmem_bytes, 8 << 20), 32 << 20))

    out = pl.pallas_call(
        _matmul_bias_kernel,
        out_shape=jax.ShapeDtypeStruct((m_pad, coutp), jnp.float32),
        grid_spec=pltpu.PrefetchScalarGridSpec(
            num_scalar_prefetch=0,
            grid=grid,
            in_specs=[
                pl.BlockSpec((tm, tk), lambda i, k: (i, k)),
                pl.BlockSpec((tk, coutp), lambda i, k: (k, 0)),
                pl.BlockSpec((1, coutp), lambda i, k: (0, 0)),
            ],
            out_specs=pl.BlockSpec((tm, coutp), lambda i, k: (i, 0)),
            scratch_shapes=[pltpu.VMEM((tm, coutp), jnp.float32)],
        ),
        compiler_params=pltpu.CompilerParams(
            dimension_semantics=("parallel", "arbitrary"),
            vmem_limit_bytes=vmem_limit,
        ),
        cost_estimate=cost,
    )(patches_p, w_p, b_p)

    return out[:M, :cout]


# --------------------------- Conv2d via im2col ------------------------------

def _im2col_nhwc(x_nchw, kh, kw, stride, padding, dilation):
    """x: (N, Cin, H, W) -> patches (N*Hout*Wout, Cin*KH*KW), plus (Hout, Wout).

    Built in NHWC order so the row dim is (N, Hout, Wout) and the reduction
    dim matches the (Cin, KH, KW) row-major order of weight.reshape(Cout, -1).
    """
    n, cin, h, w = x_nchw.shape
    hout = (h + 2 * padding - dilation * (kh - 1) - 1) // stride + 1
    wout = (w + 2 * padding - dilation * (kw - 1) - 1) // stride + 1

    x_nhwc = jnp.transpose(x_nchw, (0, 2, 3, 1))
    xp = jnp.pad(x_nhwc, ((0, 0), (padding, padding), (padding, padding), (0, 0)))

    cols = []
    for i in range(kh):
        for j in range(kw):
            h0 = i * dilation
            w0 = j * dilation
            sl = xp[:, h0:h0 + (hout - 1) * stride + 1:stride,
                       w0:w0 + (wout - 1) * stride + 1:stride, :]  # (N,Hout,Wout,Cin)
            cols.append(sl)
    # (N, Hout, Wout, Cin, KH*KW): flat index over last two dims is
    # c*(KH*KW) + (i*KW + j)  == row-major (Cin, KH, KW) -> matches weight.
    cols = jnp.stack(cols, axis=-1)
    patches = cols.reshape(n * hout * wout, cin * kh * kw)
    return patches, hout, wout


def column_parallel_conv2d(x_nchw, full_weight, full_bias, world_size,
                           *, stride=1, padding=0, dilation=1):
    """ColumnParallelConv2d.forward (gather_output=True path).

    full_weight: (Cout, Cin, KH, KW), full_bias: (Cout,).
    The per-partition convs + channel concat of the torch module are fused
    into a single full-Cout im2col matmul (numerically identical, since the
    partition weight/bias slices are contiguous along Cout).
    """
    cout, cin, kh, kw = full_weight.shape
    assert cout % world_size == 0
    n = x_nchw.shape[0]

    # im2col once (hoisted out of the world_size partition loop).
    patches, hout, wout = _im2col_nhwc(x_nchw, kh, kw, stride, padding, dilation)
    w_mat = full_weight.reshape(cout, cin * kh * kw).T          # (K, Cout)
    out = _im2col_matmul(patches, w_mat, full_bias)              # (N*Hout*Wout, Cout)

    # Single NHWC -> NCHW layout pass at the very end.
    out = out.reshape(n, hout, wout, cout)
    # TODO(synk): _WeightParallelRegion_* comm ops and grad-accumulator hook
    # registration are distributed-training machinery with no single-device
    # forward effect; only the per-partition conv + channel concat semantics
    # (fused here) are reproduced.
    return jnp.transpose(out, (0, 3, 1, 2))


# --------------------------------- main -------------------------------------

if __name__ == "__main__":
    # Module hyperparameters (groups=1, padding_mode='zeros').
    N, Cin, H, W = 2, 4, 16, 16
    Cout, K = 8, 3
    stride, padding, dilation = 1, 1, 1
    world_size = 2

    key = jax.random.PRNGKey(0)
    kx, kw_, kb = jax.random.split(key, 3)

    # Deterministic init mimicking torch.nn.Conv2d defaults:
    # kaiming_uniform_(a=sqrt(5)) -> U(-1/sqrt(fan_in), 1/sqrt(fan_in)); same bound for bias.
    fan_in = Cin * K * K
    bound = 1.0 / math.sqrt(fan_in)
    x = jax.random.normal(kx, (N, Cin, H, W), dtype=jnp.float32)
    weight = jax.random.uniform(kw_, (Cout, Cin, K, K), jnp.float32, -bound, bound)
    bias = jax.random.uniform(kb, (Cout,), jnp.float32, -bound, bound)

    fwd = jax.jit(partial(column_parallel_conv2d, world_size=world_size,
                          stride=stride, padding=padding, dilation=dilation))
    out = fwd(x, weight, bias)
    out = jax.block_until_ready(out)

    # Numerical check against XLA's conv (same semantics as torch Conv2d, NCHW).
    ref = jax.lax.conv_general_dilated(
        x, weight, window_strides=(stride, stride),
        padding=[(padding, padding), (padding, padding)],
        rhs_dilation=(dilation, dilation),
        dimension_numbers=("NCHW", "OIHW", "NCHW"),
    ) + bias.reshape(1, Cout, 1, 1)

    assert out.shape == (N, Cout, H, W), out.shape
    assert jnp.allclose(out, ref, atol=1e-4, rtol=1e-4), float(
        jnp.max(jnp.abs(out - ref)))

    print("KERNEL_OK")
</pallas_src>

<mosaic_0001>
module attributes {stable_mosaic.version = 11 : i64} {
  func.func @_matmul_bias_kernel(%arg0: i32, %arg1: i32, %arg2: memref<512x128xf32, #tpu.memory_space<vmem>>, %arg3: memref<128x128xf32, #tpu.memory_space<vmem>>, %arg4: memref<1x128xf32, #tpu.memory_space<vmem>>, %arg5: memref<512x128xf32, #tpu.memory_space<vmem>>, %arg6: memref<512x128xf32, #tpu.memory_space<vmem>>) attributes {dimension_semantics = [#tpu.dimension_semantics<parallel>, #tpu.dimension_semantics<arbitrary>], iteration_bounds = array<i64: 1, 1>, scalar_prefetch = 0 : i64, scratch_operands = 1 : i64, tpu.core_type = #tpu.core_type<tc>, window_params = [{transform_indices = @transform_0, window_bounds = array<i64: 512, 128>}, {transform_indices = @transform_1, window_bounds = array<i64: 128, 128>}, {pipeline_mode = #tpu.pipeline_mode<synchronous>, transform_indices = @transform_2, window_bounds = array<i64: 1, 128>}, {transform_indices = @transform_3, window_bounds = array<i64: 512, 128>}]} {
    %c0_i32 = arith.constant 0 : i32
    %0 = arith.cmpi eq, %arg1, %c0_i32 : i32
    %1 = arith.extui %0 : i1 to i32
    %c0_i32_0 = arith.constant 0 : i32
    %2 = arith.cmpi ne, %1, %c0_i32_0 : i32
    scf.if %2 {
      %cst_10 = arith.constant 0.000000e+00 : f32
      %12 = vector.broadcast %cst_10 : f32 to vector<512x128xf32>
      %c0_11 = arith.constant 0 : index
      %c0_12 = arith.constant 0 : index
      %13 = vector.load %arg6[%c0_11, %c0_12] : memref<512x128xf32, #tpu.memory_space<vmem>>, vector<512x128xf32>
      tpu.vector_store %arg6[%c0_11, %c0_12], %12 {strides = array<i32>} : memref<512x128xf32, #tpu.memory_space<vmem>>, vector<512x128xf32>,
    } else {
    }
    %c0 = arith.constant 0 : index
    %c0_1 = arith.constant 0 : index
    %3 = vector.load %arg6[%c0, %c0_1] : memref<512x128xf32, #tpu.memory_space<vmem>>, vector<512x128xf32>
    %c0_2 = arith.constant 0 : index
    %c0_3 = arith.constant 0 : index
    %4 = vector.load %arg2[%c0_2, %c0_3] : memref<512x128xf32, #tpu.memory_space<vmem>>, vector<512x128xf32>
    %c0_4 = arith.constant 0 : index
    %c0_5 = arith.constant 0 : index
    %5 = vector.load %arg3[%c0_4, %c0_5] : memref<128x128xf32, #tpu.memory_space<vmem>>, vector<128x128xf32>
    %cst = arith.constant dense<0.000000e+00> : vector<512x128xf32>
    %6 = tpu.matmul %4, %5, %cst {dimension_numbers = #tpu.dot_dimension_numbers<[1], [0], [0], [1], [0, 0, 1, 1], [], []>} : vector<512x128xf32>, vector<128x128xf32>, vector<512x128xf32> -> vector<512x128xf32>
    %7 = arith.addf %3, %6 : vector<512x128xf32>
    %c0_6 = arith.constant 0 : index
    %c0_7 = arith.constant 0 : index
    %8 = vector.load %arg6[%c0_6, %c0_7] : memref<512x128xf32, #tpu.memory_space<vmem>>, vector<512x128xf32>
    tpu.vector_store %arg6[%c0_6, %c0_7], %7 {strides = array<i32>} : memref<512x128xf32, #tpu.memory_space<vmem>>, vector<512x128xf32>,
    %c0_i32_8 = arith.constant 0 : i32
    %9 = arith.cmpi eq, %arg1, %c0_i32_8 : i32
    %10 = arith.extui %9 : i1 to i32
    %c0_i32_9 = arith.constant 0 : i32
    %11 = arith.cmpi ne, %10, %c0_i32_9 : i32
    scf.if %11 {
      %c0_10 = arith.constant 0 : index
      %c0_11 = arith.constant 0 : index
      %12 = vector.load %arg6[%c0_10, %c0_11] : memref<512x128xf32, #tpu.memory_space<vmem>>, vector<512x128xf32>
      %c0_12 = arith.constant 0 : index
      %c0_13 = arith.constant 0 : index
      %13 = vector.load %arg4[%c0_12, %c0_13] : memref<1x128xf32, #tpu.memory_space<vmem>>, vector<1x128xf32>
      %14 = vector.broadcast %13 : vector<1x128xf32> to vector<512x128xf32>
      %15 = arith.addf %12, %14 : vector<512x128xf32>
      %c0_14 = arith.constant 0 : index
      %c0_15 = arith.constant 0 : index
      %16 = vector.load %arg5[%c0_14, %c0_15] : memref<512x128xf32, #tpu.memory_space<vmem>>, vector<512x128xf32>
      tpu.vector_store %arg5[%c0_14, %c0_15], %15 {strides = array<i32>} : memref<512x128xf32, #tpu.memory_space<vmem>>, vector<512x128xf32>,
    } else {
    }
    return
  }
  func.func @transform_0(%arg0: i32, %arg1: i32) -> (i32, i32) {
    %c0_i32 = arith.constant 0 : i32
    return %arg0, %arg1 : i32, i32
  }
  func.func @transform_1(%arg0: i32, %arg1: i32) -> (i32, i32) {
    %c0_i32 = arith.constant 0 : i32
    %c0_i32_0 = arith.constant 0 : i32
    return %arg1, %c0_i32 : i32, i32
  }
  func.func @transform_2(%arg0: i32, %arg1: i32) -> (i32, i32) {
    %c0_i32 = arith.constant 0 : i32
    %c0_i32_0 = arith.constant 0 : i32
    %c0_i32_1 = arith.constant 0 : i32
    return %c0_i32, %c0_i32_0 : i32, i32
  }
  func.func @transform_3(%arg0: i32, %arg1: i32) -> (i32, i32) {
    %c0_i32 = arith.constant 0 : i32
    %c0_i32_0 = arith.constant 0 : i32
    return %arg0, %c0_i32 : i32, i32
  }
}

</mosaic_0001>

<llo_original>
// kernel: column_parallel_conv2d.1
$region0: #{column_parallel_conv2d.1}
  #allocation0 [shape = 'u32[]', space=smem, size = 0x4, offset = 0x4, fixed_abs, tag = 'smem constant byte address 0x4 - core index']
  #allocation1 [shape = 'u32[72,128]{1,0:T(1,128)}', space=vmem, size = 0x9000, scoped, tag = 'internal scratch']
  #allocation2 [shape = 'f32[512,128]{1,0:T(8,128)}', space=vmem, size = 0x40000, scoped, tag = 'scratch operand']
  %s0 = inlined_call_operand.vmem [shape: f32[512,128], index: 0, kind: input, shape index: {}]
  %s1 = inlined_call_operand.vmem [shape: f32[128,128], index: 1, kind: input, shape index: {}]
  %s2 = inlined_call_operand.vmem [shape: f32[1,128], index: 2, kind: input, shape index: {}]
  %s3 = inlined_call_operand.vmem [shape: f32[512,128], index: 3, kind: output, shape index: {}]
  %s4 = sld [smem:[#allocation0]]
  $region30: #{column_parallel_conv2d.1} parent=0
    _
  %s6 = ssub.s32 1, %s4
  %s7 = scalar_select 0, %s6, %s4
  // Predicated region
  $region2: #{column_parallel_conv2d.1} parent=0 // pred_check
    _
  $region3: #{column_parallel_conv2d.1} parent=0 // pred_check_branch
    %9 = sbr.rel (0) target = $region5
  $region4: #{column_parallel_conv2d.1} parent=0 // pred_region
    _
  $region5: #{column_parallel_conv2d.1} parent=0 // pred_fallthru
    _
  // Predicated region
  $region6: #{column_parallel_conv2d.1} parent=0 // pred_check
    _
  $region7: #{column_parallel_conv2d.1} parent=0 // pred_check_branch
    %11 = sbr.rel (0) target = $region9
  $region8: #{column_parallel_conv2d.1} parent=0 // pred_region
    _
  $region9: #{column_parallel_conv2d.1} parent=0 // pred_fallthru
    _
  // Predicated region
  $region10: #{column_parallel_conv2d.1} parent=0 // pred_check
    _
  $region11: #{column_parallel_conv2d.1} parent=0 // pred_check_branch
    %13 = sbr.rel (0) target = $region13
  $region12: #{column_parallel_conv2d.1} parent=0 // pred_region
    _
  $region13: #{column_parallel_conv2d.1} parent=0 // pred_fallthru
    _
  %p14 = scmp.eq.s32.totalorder 0, 0
  // Predicated region
  $region14: #{column_parallel_conv2d.1} parent=0 // pred_check
    %p15 = pneg %p14
  $region15: #{column_parallel_conv2d.1} parent=0 // pred_check_branch
    %17 = sbr.rel (%p15) target = $region17
  $region16: #{column_parallel_conv2d.1} parent=0 // pred_region
    %18 = vst [vmem:[#allocation2] sm:$0xff] 0.0
    %19 = vst [vmem:[#allocation2 + $0x8] sm:$0xff] 0.0
    %20 = vst [vmem:[#allocation2 + $0x10] sm:$0xff] 0.0
    %21 = vst [vmem:[#allocation2 + $0x18] sm:$0xff] 0.0
    %22 = vst [vmem:[#allocation2 + $0x20] sm:$0xff] 0.0
    %23 = vst [vmem:[#allocation2 + $0x28] sm:$0xff] 0.0
    %24 = vst [vmem:[#allocation2 + $0x30] sm:$0xff] 0.0
    %25 = vst [vmem:[#allocation2 + $0x38] sm:$0xff] 0.0
    %26 = vst [vmem:[#allocation2 + $0x40] sm:$0xff] 0.0
    %27 = vst [vmem:[#allocation2 + $0x48] sm:$0xff] 0.0
    %28 = vst [vmem:[#allocation2 + $0x50] sm:$0xff] 0.0
    %29 = vst [vmem:[#allocation2 + $0x58] sm:$0xff] 0.0
    %30 = vst [vmem:[#allocation2 + $0x60] sm:$0xff] 0.0
    %31 = vst [vmem:[#allocation2 + $0x68] sm:$0xff] 0.0
    %32 = vst [vmem:[#allocation2 + $0x70] sm:$0xff] 0.0
    %33 = vst [vmem:[#allocation2 + $0x78] sm:$0xff] 0.0
    %34 = vst [vmem:[#allocation2 + $0x80] sm:$0xff] 0.0
    %35 = vst [vmem:[#allocation2 + $0x88] sm:$0xff] 0.0
    %36 = vst [vmem:[#allocation2 + $0x90] sm:$0xff] 0.0
    %37 = vst [vmem:[#allocation2 + $0x98] sm:$0xff] 0.0
    %38 = vst [vmem:[#allocation2 + $0xa0] sm:$0xff] 0.0
    %39 = vst [vmem:[#allocation2 + $0xa8] sm:$0xff] 0.0
    %40 = vst [vmem:[#allocation2 + $0xb0] sm:$0xff] 0.0
    %41 = vst [vmem:[#allocation2 + $0xb8] sm:$0xff] 0.0
    %42 = vst [vmem:[#allocation2 + $0xc0] sm:$0xff] 0.0
    %43 = vst [vmem:[#allocation2 + $0xc8] sm:$0xff] 0.0
    %44 = vst [vmem:[#allocation2 + $0xd0] sm:$0xff] 0.0
    %45 = vst [vmem:[#allocation2 + $0xd8] sm:$0xff] 0.0
    %46 = vst [vmem:[#allocation2 + $0xe0] sm:$0xff] 0.0
    %47 = vst [vmem:[#allocation2 + $0xe8] sm:$0xff] 0.0
    %48 = vst [vmem:[#allocation2 + $0xf0] sm:$0xff] 0.0
    %49 = vst [vmem:[#allocation2 + $0xf8] sm:$0xff] 0.0
    %50 = vst [vmem:[#allocation2 + $0x100] sm:$0xff] 0.0
    %51 = vst [vmem:[#allocation2 + $0x108] sm:$0xff] 0.0
    %52 = vst [vmem:[#allocation2 + $0x110] sm:$0xff] 0.0
    %53 = vst [vmem:[#allocation2 + $0x118] sm:$0xff] 0.0
    %54 = vst [vmem:[#allocation2 + $0x120] sm:$0xff] 0.0
    %55 = vst [vmem:[#allocation2 + $0x128] sm:$0xff] 0.0
    %56 = vst [vmem:[#allocation2 + $0x130] sm:$0xff] 0.0
    %57 = vst [vmem:[#allocation2 + $0x138] sm:$0xff] 0.0
    %58 = vst [vmem:[#allocation2 + $0x140] sm:$0xff] 0.0
    %59 = vst [vmem:[#allocation2 + $0x148] sm:$0xff] 0.0
    %60 = vst [vmem:[#allocation2 + $0x150] sm:$0xff] 0.0
    %61 = vst [vmem:[#allocation2 + $0x158] sm:$0xff] 0.0
    %62 = vst [vmem:[#allocation2 + $0x160] sm:$0xff] 0.0
    %63 = vst [vmem:[#allocation2 + $0x168] sm:$0xff] 0.0
    %64 = vst [vmem:[#allocation2 + $0x170] sm:$0xff] 0.0
    %65 = vst [vmem:[#allocation2 + $0x178] sm:$0xff] 0.0
    %66 = vst [vmem:[#allocation2 + $0x180] sm:$0xff] 0.0
    %67 = vst [vmem:[#allocation2 + $0x188] sm:$0xff] 0.0
    %68 = vst [vmem:[#allocation2 + $0x190] sm:$0xff] 0.0
    %69 = vst [vmem:[#allocation2 + $0x198] sm:$0xff] 0.0
    %70 = vst [vmem:[#allocation2 + $0x1a0] sm:$0xff] 0.0
    %71 = vst [vmem:[#allocation2 + $0x1a8] sm:$0xff] 0.0
    %72 = vst [vmem:[#allocation2 + $0x1b0] sm:$0xff] 0.0
    %73 = vst [vmem:[#allocation2 + $0x1b8] sm:$0xff] 0.0
    %74 = vst [vmem:[#allocation2 + $0x1c0] sm:$0xff] 0.0
    %75 = vst [vmem:[#allocation2 + $0x1c8] sm:$0xff] 0.0
    %76 = vst [vmem:[#allocation2 + $0x1d0] sm:$0xff] 0.0
    %77 = vst [vmem:[#allocation2 + $0x1d8] sm:$0xff] 0.0
    %78 = vst [vmem:[#allocation2 + $0x1e0] sm:$0xff] 0.0
    %79 = vst [vmem:[#allocation2 + $0x1e8] sm:$0xff] 0.0
    %80 = vst [vmem:[#allocation2 + $0x1f0] sm:$0xff] 0.0
    %81 = vst [vmem:[#allocation2 + $0x1f8] sm:$0xff] 0.0
  $region17: #{column_parallel_conv2d.1} parent=0 // pred_fallthru
    _
  %v82 = vld [vmem:[#allocation2] sm:$0xff]
  %v83 = vld [vmem:[#allocation2 + $0x8] sm:$0xff]
  %v84 = vld [vmem:[#allocation2 + $0x10] sm:$0xff]
  %v85 = vld [vmem:[#allocation2 + $0x18] sm:$0xff]
  %v86 = vld [vmem:[#allocation2 + $0x20] sm:$0xff]
  %v87 = vld [vmem:[#allocation2 + $0x28] sm:$0xff]
  %v88 = vld [vmem:[#allocation2 + $0x30] sm:$0xff]
  %v89 = vld [vmem:[#allocation2 + $0x38] sm:$0xff]
  %v90 = vld [vmem:[#allocation2 + $0x40] sm:$0xff]
  %v91 = vld [vmem:[#allocation2 + $0x48] sm:$0xff]
  %v92 = vld [vmem:[#allocation2 + $0x50] sm:$0xff]
  %v93 = vld [vmem:[#allocation2 + $0x58] sm:$0xff]
  %v94 = vld [vmem:[#allocation2 + $0x60] sm:$0xff]
  %v95 = vld [vmem:[#allocation2 + $0x68] sm:$0xff]
  %v96 = vld [vmem:[#allocation2 + $0x70] sm:$0xff]
  %v97 = vld [vmem:[#allocation2 + $0x78] sm:$0xff]
  %v98 = vld [vmem:[#allocation2 + $0x80] sm:$0xff]
  %v99 = vld [vmem:[#allocation2 + $0x88] sm:$0xff]
  %v100 = vld [vmem:[#allocation2 + $0x90] sm:$0xff]
  %v101 = vld [vmem:[#allocation2 + $0x98] sm:$0xff]
  %v102 = vld [vmem:[#allocation2 + $0xa0] sm:$0xff]
  %v103 = vld [vmem:[#allocation2 + $0xa8] sm:$0xff]
  %v104 = vld [vmem:[#allocation2 + $0xb0] sm:$0xff]
  %v105 = vld [vmem:[#allocation2 + $0xb8] sm:$0xff]
  %v106 = vld [vmem:[#allocation2 + $0xc0] sm:$0xff]
  %v107 = vld [vmem:[#allocation2 + $0xc8] sm:$0xff]
  %v108 = vld [vmem:[#allocation2 + $0xd0] sm:$0xff]
  %v109 = vld [vmem:[#allocation2 + $0xd8] sm:$0xff]
  %v110 = vld [vmem:[#allocation2 + $0xe0] sm:$0xff]
  %v111 = vld [vmem:[#allocation2 + $0xe8] sm:$0xff]
  %v112 = vld [vmem:[#allocation2 + $0xf0] sm:$0xff]
  %v113 = vld [vmem:[#allocation2 + $0xf8] sm:$0xff]
  %v114 = vld [vmem:[#allocation2 + $0x100] sm:$0xff]
  %v115 = vld [vmem:[#allocation2 + $0x108] sm:$0xff]
  %v116 = vld [vmem:[#allocation2 + $0x110] sm:$0xff]
  %v117 = vld [vmem:[#allocation2 + $0x118] sm:$0xff]
  %v118 = vld [vmem:[#allocation2 + $0x120] sm:$0xff]
  %v119 = vld [vmem:[#allocation2 + $0x128] sm:$0xff]
  %v120 = vld [vmem:[#allocation2 + $0x130] sm:$0xff]
  %v121 = vld [vmem:[#allocation2 + $0x138] sm:$0xff]
  %v122 = vld [vmem:[#allocation2 + $0x140] sm:$0xff]
  %v123 = vld [vmem:[#allocation2 + $0x148] sm:$0xff]
  %v124 = vld [vmem:[#allocation2 + $0x150] sm:$0xff]
  %v125 = vld [vmem:[#allocation2 + $0x158] sm:$0xff]
  %v126 = vld [vmem:[#allocation2 + $0x160] sm:$0xff]
  %v127 = vld [vmem:[#allocation2 + $0x168] sm:$0xff]
  %v128 = vld [vmem:[#allocation2 + $0x170] sm:$0xff]
  %v129 = vld [vmem:[#allocation2 + $0x178] sm:$0xff]
  %v130 = vld [vmem:[#allocation2 + $0x180] sm:$0xff]
  %v131 = vld [vmem:[#allocation2 + $0x188] sm:$0xff]
  %v132 = vld [vmem:[#allocation2 + $0x190] sm:$0xff]
  %v133 = vld [vmem:[#allocation2 + $0x198] sm:$0xff]
  %v134 = vld [vmem:[#allocation2 + $0x1a0] sm:$0xff]
  %v135 = vld [vmem:[#allocation2 + $0x1a8] sm:$0xff]
  %v136 = vld [vmem:[#allocation2 + $0x1b0] sm:$0xff]
  %v137 = vld [vmem:[#allocation2 + $0x1b8] sm:$0xff]
  %v138 = vld [vmem:[#allocation2 + $0x1c0] sm:$0xff]
  %v139 = vld [vmem:[#allocation2 + $0x1c8] sm:$0xff]
  %v140 = vld [vmem:[#allocation2 + $0x1d0] sm:$0xff]
  %v141 = vld [vmem:[#allocation2 + $0x1d8] sm:$0xff]
  %v142 = vld [vmem:[#allocation2 + $0x1e0] sm:$0xff]
  %v143 = vld [vmem:[#allocation2 + $0x1e8] sm:$0xff]
  %v144 = vld [vmem:[#allocation2 + $0x1f0] sm:$0xff]
  %v145 = vld [vmem:[#allocation2 + $0x1f8] sm:$0xff]
  %v146 = vld [vmem:[%s0] sm:$0xff]
  %v147 = vld [vmem:[%s0 + $0x8] sm:$0xff]
  %v148 = vld [vmem:[%s0 + $0x10] sm:$0xff]
  %v149 = vld [vmem:[%s0 + $0x18] sm:$0xff]
  %v150 = vld [vmem:[%s0 + $0x20] sm:$0xff]
  %v151 = vld [vmem:[%s0 + $0x28] sm:$0xff]
  %v152 = vld [vmem:[%s0 + $0x30] sm:$0xff]
  %v153 = vld [vmem:[%s0 + $0x38] sm:$0xff]
  %v154 = vld [vmem:[%s0 + $0x40] sm:$0xff]
  %v155 = vld [vmem:[%s0 + $0x48] sm:$0xff]
  %v156 = vld [vmem:[%s0 + $0x50] sm:$0xff]
  %v157 = vld [vmem:[%s0 + $0x58] sm:$0xff]
  %v158 = vld [vmem:[%s0 + $0x60] sm:$0xff]
  %v159 = vld [vmem:[%s0 + $0x68] sm:$0xff]
  %v160 = vld [vmem:[%s0 + $0x70] sm:$0xff]
  %v161 = vld [vmem:[%s0 + $0x78] sm:$0xff]
  %v162 = vld [vmem:[%s0 + $0x80] sm:$0xff]
  %v163 = vld [vmem:[%s0 + $0x88] sm:$0xff]
  %v164 = vld [vmem:[%s0 + $0x90] sm:$0xff]
  %v165 = vld [vmem:[%s0 + $0x98] sm:$0xff]
  %v166 = vld [vmem:[%s0 + $0xa0] sm:$0xff]
  %v167 = vld [vmem:[%s0 + $0xa8] sm:$0xff]
  %v168 = vld [vmem:[%s0 + $0xb0] sm:$0xff]
  %v169 = vld [vmem:[%s0 + $0xb8] sm:$0xff]
  %v170 = vld [vmem:[%s0 + $0xc0] sm:$0xff]
  %v171 = vld [vmem:[%s0 + $0xc8] sm:$0xff]
  %v172 = vld [vmem:[%s0 + $0xd0] sm:$0xff]
  %v173 = vld [vmem:[%s0 + $0xd8] sm:$0xff]
  %v174 = vld [vmem:[%s0 + $0xe0] sm:$0xff]
  %v175 = vld [vmem:[%s0 + $0xe8] sm:$0xff]
  %v176 = vld [vmem:[%s0 + $0xf0] sm:$0xff]
  %v177 = vld [vmem:[%s0 + $0xf8] sm:$0xff]
  %v178 = vld [vmem:[%s0 + $0x100] sm:$0xff]
  %v179 = vld [vmem:[%s0 + $0x108] sm:$0xff]
  %v180 = vld [vmem:[%s0 + $0x110] sm:$0xff]
  %v181 = vld [vmem:[%s0 + $0x118] sm:$0xff]
  %v182 = vld [vmem:[%s0 + $0x120] sm:$0xff]
  %v183 = vld [vmem:[%s0 + $0x128] sm:$0xff]
  %v184 = vld [vmem:[%s0 + $0x130] sm:$0xff]
  %v185 = vld [vmem:[%s0 + $0x138] sm:$0xff]
  %v186 = vld [vmem:[%s0 + $0x140] sm:$0xff]
  %v187 = vld [vmem:[%s0 + $0x148] sm:$0xff]
  %v188 = vld [vmem:[%s0 + $0x150] sm:$0xff]
  %v189 = vld [vmem:[%s0 + $0x158] sm:$0xff]
  %v190 = vld [vmem:[%s0 + $0x160] sm:$0xff]
  %v191 = vld [vmem:[%s0 + $0x168] sm:$0xff]
  %v192 = vld [vmem:[%s0 + $0x170] sm:$0xff]
  %v193 = vld [vmem:[%s0 + $0x178] sm:$0xff]
  %v194 = vld [vmem:[%s0 + $0x180] sm:$0xff]
  %v195 = vld [vmem:[%s0 + $0x188] sm:$0xff]
  %v196 = vld [vmem:[%s0 + $0x190] sm:$0xff]
  %v197 = vld [vmem:[%s0 + $0x198] sm:$0xff]
  %v198 = vld [vmem:[%s0 + $0x1a0] sm:$0xff]
  %v199 = vld [vmem:[%s0 + $0x1a8] sm:$0xff]
  %v200 = vld [vmem:[%s0 + $0x1b0] sm:$0xff]
  %v201 = vld [vmem:[%s0 + $0x1b8] sm:$0xff]
  %v202 = vld [vmem:[%s0 + $0x1c0] sm:$0xff]
  %v203 = vld [vmem:[%s0 + $0x1c8] sm:$0xff]
  %v204 = vld [vmem:[%s0 + $0x1d0] sm:$0xff]
  %v205 = vld [vmem:[%s0 + $0x1d8] sm:$0xff]
  %v206 = vld [vmem:[%s0 + $0x1e0] sm:$0xff]
  %v207 = vld [vmem:[%s0 + $0x1e8] sm:$0xff]
  %v208 = vld [vmem:[%s0 + $0x1f0] sm:$0xff]
  %v209 = vld [vmem:[%s0 + $0x1f8] sm:$0xff]
  %v210 = vld [vmem:[%s1] sm:$0xff]
  %v211 = vld [vmem:[%s1 + $0x8] sm:$0xff]
  %v212 = vld [vmem:[%s1 + $0x10] sm:$0xff]
  %v213 = vld [vmem:[%s1 + $0x18] sm:$0xff]
  %v214 = vld [vmem:[%s1 + $0x20] sm:$0xff]
  %v215 = vld [vmem:[%s1 + $0x28] sm:$0xff]
  %v216 = vld [vmem:[%s1 + $0x30] sm:$0xff]
  %v217 = vld [vmem:[%s1 + $0x38] sm:$0xff]
  %v218 = vld [vmem:[%s1 + $0x40] sm:$0xff]
  %v219 = vld [vmem:[%s1 + $0x48] sm:$0xff]
  %v220 = vld [vmem:[%s1 + $0x50] sm:$0xff]
  %v221 = vld [vmem:[%s1 + $0x58] sm:$0xff]
  %v222 = vld [vmem:[%s1 + $0x60] sm:$0xff]
  %v223 = vld [vmem:[%s1 + $0x68] sm:$0xff]
  %v224 = vld [vmem:[%s1 + $0x70] sm:$0xff]
  %v225 = vld [vmem:[%s1 + $0x78] sm:$0xff]
  %226 = vmatpush.msra.mxu0 %v225
  %227 = vmatpush.msra.mxu0 %v224
  %228 = vmatpush.msra.mxu0 %v223
  %229 = vmatpush.msra.mxu0 %v222
  %230 = vmatpush.msra.mxu0 %v221
  %231 = vmatpush.msra.mxu0 %v220
  %232 = vmatpush.msra.mxu0 %v219
  %233 = vmatpush.msra.mxu0 %v218
  %234 = vmatpush.msra.mxu0 %v217
  %235 = vmatpush.msra.mxu0 %v216
  %236 = vmatpush.msra.mxu0 %v215
  %237 = vmatpush.msra.mxu0 %v214
  %238 = vmatpush.msra.mxu0 %v213
  %239 = vmatpush.msra.mxu0 %v212
  %240 = vmatpush.msra.mxu0 %v211
  %241 = vmatpush.msra.mxu0 %v210
  %242 = vmatmul.f32.gmra.mxu0 %v146
  %v243 = vpop.f32.mrf.mxu0
  %v244 = vadd.f32 0.0, %v243
  %245 = vmatmul.f32.gmra.mxu0 %v147
  %v246 = vpop.f32.mrf.mxu0
  %v247 = vadd.f32 0.0, %v246
  %248 = vmatmul.f32.gmra.mxu0 %v148
  %v249 = vpop.f32.mrf.mxu0
  %v250 = vadd.f32 0.0, %v249
  %251 = vmatmul.f32.gmra.mxu0 %v149
  %v252 = vpop.f32.mrf.mxu0
  %v253 = vadd.f32 0.0, %v252
  %254 = vmatmul.f32.gmra.mxu0 %v150
  %v255 = vpop.f32.mrf.mxu0
  %v256 = vadd.f32 0.0, %v255
  %257 = vmatmul.f32.gmra.mxu0 %v151
  %v258 = vpop.f32.mrf.mxu0
  %v259 = vadd.f32 0.0, %v258
  %260 = vmatmul.f32.gmra.mxu0 %v152
  %v261 = vpop.f32.mrf.mxu0
  %v262 = vadd.f32 0.0, %v261
  %263 = vmatmul.f32.gmra.mxu0 %v153
  %v264 = vpop.f32.mrf.mxu0
  %v265 = vadd.f32 0.0, %v264
  %266 = vmatmul.f32.gmra.mxu0 %v154
  %v267 = vpop.f32.mrf.mxu0
  %v268 = vadd.f32 0.0, %v267
  %269 = vmatmul.f32.gmra.mxu0 %v155
  %v270 = vpop.f32.mrf.mxu0
  %v271 = vadd.f32 0.0, %v270
  %272 = vmatmul.f32.gmra.mxu0 %v156
  %v273 = vpop.f32.mrf.mxu0
  %v274 = vadd.f32 0.0, %v273
  %275 = vmatmul.f32.gmra.mxu0 %v157
  %v276 = vpop.f32.mrf.mxu0
  %v277 = vadd.f32 0.0, %v276
  %278 = vmatmul.f32.gmra.mxu0 %v158
  %v279 = vpop.f32.mrf.mxu0
  %v280 = vadd.f32 0.0, %v279
  %281 = vmatmul.f32.gmra.mxu0 %v159
  %v282 = vpop.f32.mrf.mxu0
  %v283 = vadd.f32 0.0, %v282
  %284 = vmatmul.f32.gmra.mxu0 %v160
  %v285 = vpop.f32.mrf.mxu0
  %v286 = vadd.f32 0.0, %v285
  %287 = vmatmul.f32.gmra.mxu0 %v161
  %v288 = vpop.f32.mrf.mxu0
  %v289 = vadd.f32 0.0, %v288
  %290 = vmatmul.f32.gmra.mxu0 %v162
  %v291 = vpop.f32.mrf.mxu0
  %v292 = vadd.f32 0.0, %v291
  %293 = vmatmul.f32.gmra.mxu0 %v163
  %v294 = vpop.f32.mrf.mxu0
  %v295 = vadd.f32 0.0, %v294
  %296 = vmatmul.f32.gmra.mxu0 %v164
  %v297 = vpop.f32.mrf.mxu0
  %v298 = vadd.f32 0.0, %v297
  %299 = vmatmul.f32.gmra.mxu0 %v165
  %v300 = vpop.f32.mrf.mxu0
  %v301 = vadd.f32 0.0, %v300
  %302 = vmatmul.f32.gmra.mxu0 %v166
  %v303 = vpop.f32.mrf.mxu0
  %v304 = vadd.f32 0.0, %v303
  %305 = vmatmul.f32.gmra.mxu0 %v167
  %v306 = vpop.f32.mrf.mxu0
  %v307 = vadd.f32 0.0, %v306
  %308 = vmatmul.f32.gmra.mxu0 %v168
  %v309 = vpop.f32.mrf.mxu0
  %v310 = vadd.f32 0.0, %v309
  %311 = vmatmul.f32.gmra.mxu0 %v169
  %v312 = vpop.f32.mrf.mxu0
  %v313 = vadd.f32 0.0, %v312
  %314 = vmatmul.f32.gmra.mxu0 %v170
  %v315 = vpop.f32.mrf.mxu0
  %v316 = vadd.f32 0.0, %v315
  %317 = vmatmul.f32.gmra.mxu0 %v171
  %v318 = vpop.f32.mrf.mxu0
  %v319 = vadd.f32 0.0, %v318
  %320 = vmatmul.f32.gmra.mxu0 %v172
  %v321 = vpop.f32.mrf.mxu0
  %v322 = vadd.f32 0.0, %v321
  %323 = vmatmul.f32.gmra.mxu0 %v173
  %v324 = vpop.f32.mrf.mxu0
  %v325 = vadd.f32 0.0, %v324
  %326 = vmatmul.f32.gmra.mxu0 %v174
  %v327 = vpop.f32.mrf.mxu0
  %v328 = vadd.f32 0.0, %v327
  %329 = vmatmul.f32.gmra.mxu0 %v175
  %v330 = vpop.f32.mrf.mxu0
  %v331 = vadd.f32 0.0, %v330
  %332 = vmatmul.f32.gmra.mxu0 %v176
  %v333 = vpop.f32.mrf.mxu0
  %v334 = vadd.f32 0.0, %v333
  %335 = vmatmul.f32.gmra.mxu0 %v177
  %v336 = vpop.f32.mrf.mxu0
  %v337 = vadd.f32 0.0, %v336
  %338 = vmatmul.f32.gmra.mxu0 %v178
  %v339 = vpop.f32.mrf.mxu0
  %v340 = vadd.f32 0.0, %v339
  %341 = vmatmul.f32.gmra.mxu0 %v179
  %v342 = vpop.f32.mrf.mxu0
  %v343 = vadd.f32 0.0, %v342
  %344 = vmatmul.f32.gmra.mxu0 %v180
  %v345 = vpop.f32.mrf.mxu0
  %v346 = vadd.f32 0.0, %v345
  %347 = vmatmul.f32.gmra.mxu0 %v181
  %v348 = vpop.f32.mrf.mxu0
  %v349 = vadd.f32 0.0, %v348
  %350 = vmatmul.f32.gmra.mxu0 %v182
  %v351 = vpop.f32.mrf.mxu0
  %v352 = vadd.f32 0.0, %v351
  %353 = vmatmul.f32.gmra.mxu0 %v183
  %v354 = vpop.f32.mrf.mxu0
  %v355 = vadd.f32 0.0, %v354
  %356 = vmatmul.f32.gmra.mxu0 %v184
  %v357 = vpop.f32.mrf.mxu0
  %v358 = vadd.f32 0.0, %v357
  %359 = vmatmul.f32.gmra.mxu0 %v185
  %v360 = vpop.f32.mrf.mxu0
  %v361 = vadd.f32 0.0, %v360
  %362 = vmatmul.f32.gmra.mxu0 %v186
  %v363 = vpop.f32.mrf.mxu0
  %v364 = vadd.f32 0.0, %v363
  %365 = vmatmul.f32.gmra.mxu0 %v187
  %v366 = vpop.f32.mrf.mxu0
  %v367 = vadd.f32 0.0, %v366
  %368 = vmatmul.f32.gmra.mxu0 %v188
  %v369 = vpop.f32.mrf.mxu0
  %v370 = vadd.f32 0.0, %v369
  %371 = vmatmul.f32.gmra.mxu0 %v189
  %v372 = vpop.f32.mrf.mxu0
  %v373 = vadd.f32 0.0, %v372
  %374 = vmatmul.f32.gmra.mxu0 %v190
  %v375 = vpop.f32.mrf.mxu0
  %v376 = vadd.f32 0.0, %v375
  %377 = vmatmul.f32.gmra.mxu0 %v191
  %v378 = vpop.f32.mrf.mxu0
  %v379 = vadd.f32 0.0, %v378
  %380 = vmatmul.f32.gmra.mxu0 %v192
  %v381 = vpop.f32.mrf.mxu0
  %v382 = vadd.f32 0.0, %v381
  %383 = vmatmul.f32.gmra.mxu0 %v193
  %v384 = vpop.f32.mrf.mxu0
  %v385 = vadd.f32 0.0, %v384
  %386 = vmatmul.f32.gmra.mxu0 %v194
  %v387 = vpop.f32.mrf.mxu0
  %v388 = vadd.f32 0.0, %v387
  %389 = vmatmul.f32.gmra.mxu0 %v195
  %v390 = vpop.f32.mrf.mxu0
  %v391 = vadd.f32 0.0, %v390
  %392 = vmatmul.f32.gmra.mxu0 %v196
  %v393 = vpop.f32.mrf.mxu0
  %v394 = vadd.f32 0.0, %v393
  %395 = vmatmul.f32.gmra.mxu0 %v197
  %v396 = vpop.f32.mrf.mxu0
  %v397 = vadd.f32 0.0, %v396
  %398 = vmatmul.f32.gmra.mxu0 %v198
  %v399 = vpop.f32.mrf.mxu0
  %v400 = vadd.f32 0.0, %v399
  %401 = vmatmul.f32.gmra.mxu0 %v199
  %v402 = vpop.f32.mrf.mxu0
  %v403 = vadd.f32 0.0, %v402
  %404 = vmatmul.f32.gmra.mxu0 %v200
  %v405 = vpop.f32.mrf.mxu0
  %v406 = vadd.f32 0.0, %v405
  %407 = vmatmul.f32.gmra.mxu0 %v201
  %v408 = vpop.f32.mrf.mxu0
  %v409 = vadd.f32 0.0, %v408
  %410 = vmatmul.f32.gmra.mxu0 %v202
  %v411 = vpop.f32.mrf.mxu0
  %v412 = vadd.f32 0.0, %v411
  %413 = vmatmul.f32.gmra.mxu0 %v203
  %v414 = vpop.f32.mrf.mxu0
  %v415 = vadd.f32 0.0, %v414
  %416 = vmatmul.f32.gmra.mxu0 %v204
  %v417 = vpop.f32.mrf.mxu0
  %v418 = vadd.f32 0.0, %v417
  %419 = vmatmul.f32.gmra.mxu0 %v205
  %v420 = vpop.f32.mrf.mxu0
  %v421 = vadd.f32 0.0, %v420
  %422 = vmatmul.f32.gmra.mxu0 %v206
  %v423 = vpop.f32.mrf.mxu0
  %v424 = vadd.f32 0.0, %v423
  %425 = vmatmul.f32.gmra.mxu0 %v207
  %v426 = vpop.f32.mrf.mxu0
  %v427 = vadd.f32 0.0, %v426
  %428 = vmatmul.f32.gmra.mxu0 %v208
  %v429 = vpop.f32.mrf.mxu0
  %v430 = vadd.f32 0.0, %v429
  %431 = vmatmul.f32.gmra.mxu0 %v209
  %v432 = vpop.f32.mrf.mxu0
  %v433 = vadd.f32 0.0, %v432
  %434 = vdwg.mxu0
  %v435 = vadd.f32 %v82, %v244
  %v436 = vadd.f32 %v83, %v247
  %v437 = vadd.f32 %v84, %v250
  %v438 = vadd.f32 %v85, %v253
  %v439 = vadd.f32 %v86, %v256
  %v440 = vadd.f32 %v87, %v259
  %v441 = vadd.f32 %v88, %v262
  %v442 = vadd.f32 %v89, %v265
  %v443 = vadd.f32 %v90, %v268
  %v444 = vadd.f32 %v91, %v271
  %v445 = vadd.f32 %v92, %v274
  %v446 = vadd.f32 %v93, %v277
  %v447 = vadd.f32 %v94, %v280
  %v448 = vadd.f32 %v95, %v283
  %v449 = vadd.f32 %v96, %v286
  %v450 = vadd.f32 %v97, %v289
  %v451 = vadd.f32 %v98, %v292
  %v452 = vadd.f32 %v99, %v295
  %v453 = vadd.f32 %v100, %v298
  %v454 = vadd.f32 %v101, %v301
  %v455 = vadd.f32 %v102, %v304
  %v456 = vadd.f32 %v103, %v307
  %v457 = vadd.f32 %v104, %v310
  %v458 = vadd.f32 %v105, %v313
  %v459 = vadd.f32 %v106, %v316
  %v460 = vadd.f32 %v107, %v319
  %v461 = vadd.f32 %v108, %v322
  %v462 = vadd.f32 %v109, %v325
  %v463 = vadd.f32 %v110, %v328
  %v464 = vadd.f32 %v111, %v331
  %v465 = vadd.f32 %v112, %v334
  %v466 = vadd.f32 %v113, %v337
  %v467 = vadd.f32 %v114, %v340
  %v468 = vadd.f32 %v115, %v343
  %v469 = vadd.f32 %v116, %v346
  %v470 = vadd.f32 %v117, %v349
  %v471 = vadd.f32 %v118, %v352
  %v472 = vadd.f32 %v119, %v355
  %v473 = vadd.f32 %v120, %v358
  %v474 = vadd.f32 %v121, %v361
  %v475 = vadd.f32 %v122, %v364
  %v476 = vadd.f32 %v123, %v367
  %v477 = vadd.f32 %v124, %v370
  %v478 = vadd.f32 %v125, %v373
  %v479 = vadd.f32 %v126, %v376
  %v480 = vadd.f32 %v127, %v379
  %v481 = vadd.f32 %v128, %v382
  %v482 = vadd.f32 %v129, %v385
  %v483 = vadd.f32 %v130, %v388
  %v484 = vadd.f32 %v131, %v391
  %v485 = vadd.f32 %v132, %v394
  %v486 = vadd.f32 %v133, %v397
  %v487 = vadd.f32 %v134, %v400
  %v488 = vadd.f32 %v135, %v403
  %v489 = vadd.f32 %v136, %v406
  %v490 = vadd.f32 %v137, %v409
  %v491 = vadd.f32 %v138, %v412
  %v492 = vadd.f32 %v139, %v415
  %v493 = vadd.f32 %v140, %v418
  %v494 = vadd.f32 %v141, %v421
  %v495 = vadd.f32 %v142, %v424
  %v496 = vadd.f32 %v143, %v427
  %v497 = vadd.f32 %v144, %v430
  %v498 = vadd.f32 %v145, %v433
  %499 = vst [vmem:[#allocation2] sm:$0xff] %v435
  %500 = vst [vmem:[#allocation2 + $0x8] sm:$0xff] %v436
  %501 = vst [vmem:[#allocation2 + $0x10] sm:$0xff] %v437
  %502 = vst [vmem:[#allocation2 + $0x18] sm:$0xff] %v438
  %503 = vst [vmem:[#allocation2 + $0x20] sm:$0xff] %v439
  %504 = vst [vmem:[#allocation2 + $0x28] sm:$0xff] %v440
  %505 = vst [vmem:[#allocation2 + $0x30] sm:$0xff] %v441
  %506 = vst [vmem:[#allocation2 + $0x38] sm:$0xff] %v442
  %507 = vst [vmem:[#allocation2 + $0x40] sm:$0xff] %v443
  %508 = vst [vmem:[#allocation2 + $0x48] sm:$0xff] %v444
  %509 = vst [vmem:[#allocation2 + $0x50] sm:$0xff] %v445
  %510 = vst [vmem:[#allocation2 + $0x58] sm:$0xff] %v446
  %511 = vst [vmem:[#allocation2 + $0x60] sm:$0xff] %v447
  %512 = vst [vmem:[#allocation2 + $0x68] sm:$0xff] %v448
  %513 = vst [vmem:[#allocation2 + $0x70] sm:$0xff] %v449
  %514 = vst [vmem:[#allocation2 + $0x78] sm:$0xff] %v450
  %515 = vst [vmem:[#allocation2 + $0x80] sm:$0xff] %v451
  %516 = vst [vmem:[#allocation2 + $0x88] sm:$0xff] %v452
  %517 = vst [vmem:[#allocation2 + $0x90] sm:$0xff] %v453
  %518 = vst [vmem:[#allocation2 + $0x98] sm:$0xff] %v454
  %519 = vst [vmem:[#allocation2 + $0xa0] sm:$0xff] %v455
  %520 = vst [vmem:[#allocation2 + $0xa8] sm:$0xff] %v456
  %521 = vst [vmem:[#allocation2 + $0xb0] sm:$0xff] %v457
  %522 = vst [vmem:[#allocation2 + $0xb8] sm:$0xff] %v458
  %523 = vst [vmem:[#allocation2 + $0xc0] sm:$0xff] %v459
  %524 = vst [vmem:[#allocation2 + $0xc8] sm:$0xff] %v460
  %525 = vst [vmem:[#allocation2 + $0xd0] sm:$0xff] %v461
  %526 = vst [vmem:[#allocation2 + $0xd8] sm:$0xff] %v462
  %527 = vst [vmem:[#allocation2 + $0xe0] sm:$0xff] %v463
  %528 = vst [vmem:[#allocation2 + $0xe8] sm:$0xff] %v464
  %529 = vst [vmem:[#allocation2 + $0xf0] sm:$0xff] %v465
  %530 = vst [vmem:[#allocation2 + $0xf8] sm:$0xff] %v466
  %531 = vst [vmem:[#allocation2 + $0x100] sm:$0xff] %v467
  %532 = vst [vmem:[#allocation2 + $0x108] sm:$0xff] %v468
  %533 = vst [vmem:[#allocation2 + $0x110] sm:$0xff] %v469
  %534 = vst [vmem:[#allocation2 + $0x118] sm:$0xff] %v470
  %535 = vst [vmem:[#allocation2 + $0x120] sm:$0xff] %v471
  %536 = vst [vmem:[#allocation2 + $0x128] sm:$0xff] %v472
  %537 = vst [vmem:[#allocation2 + $0x130] sm:$0xff] %v473
  %538 = vst [vmem:[#allocation2 + $0x138] sm:$0xff] %v474
  %539 = vst [vmem:[#allocation2 + $0x140] sm:$0xff] %v475
  %540 = vst [vmem:[#allocation2 + $0x148] sm:$0xff] %v476
  %541 = vst [vmem:[#allocation2 + $0x150] sm:$0xff] %v477
  %542 = vst [vmem:[#allocation2 + $0x158] sm:$0xff] %v478
  %543 = vst [vmem:[#allocation2 + $0x160] sm:$0xff] %v479
  %544 = vst [vmem:[#allocation2 + $0x168] sm:$0xff] %v480
  %545 = vst [vmem:[#allocation2 + $0x170] sm:$0xff] %v481
  %546 = vst [vmem:[#allocation2 + $0x178] sm:$0xff] %v482
  %547 = vst [vmem:[#allocation2 + $0x180] sm:$0xff] %v483
  %548 = vst [vmem:[#allocation2 + $0x188] sm:$0xff] %v484
  %549 = vst [vmem:[#allocation2 + $0x190] sm:$0xff] %v485
  %550 = vst [vmem:[#allocation2 + $0x198] sm:$0xff] %v486
  %551 = vst [vmem:[#allocation2 + $0x1a0] sm:$0xff] %v487
  %552 = vst [vmem:[#allocation2 + $0x1a8] sm:$0xff] %v488
  %553 = vst [vmem:[#allocation2 + $0x1b0] sm:$0xff] %v489
  %554 = vst [vmem:[#allocation2 + $0x1b8] sm:$0xff] %v490
  %555 = vst [vmem:[#allocation2 + $0x1c0] sm:$0xff] %v491
  %556 = vst [vmem:[#allocation2 + $0x1c8] sm:$0xff] %v492
  %557 = vst [vmem:[#allocation2 + $0x1d0] sm:$0xff] %v493
  %558 = vst [vmem:[#allocation2 + $0x1d8] sm:$0xff] %v494
  %559 = vst [vmem:[#allocation2 + $0x1e0] sm:$0xff] %v495
  %560 = vst [vmem:[#allocation2 + $0x1e8] sm:$0xff] %v496
  %561 = vst [vmem:[#allocation2 + $0x1f0] sm:$0xff] %v497
  %562 = vst [vmem:[#allocation2 + $0x1f8] sm:$0xff] %v498
  // Predicated region
  $region18: #{column_parallel_conv2d.1} parent=0 // pred_check
    %p563 = pneg %p14
  $region19: #{column_parallel_conv2d.1} parent=0 // pred_check_branch
    %565 = sbr.rel (%p563) target = $region21
  $region20: #{column_parallel_conv2d.1} parent=0 // pred_region
    %v566 = vld [vmem:[#allocation2] sm:$0xff]
    %v567 = vld [vmem:[#allocation2 + $0x8] sm:$0xff]
    %v568 = vld [vmem:[#allocation2 + $0x10] sm:$0xff]
    %v569 = vld [vmem:[#allocation2 + $0x18] sm:$0xff]
    %v570 = vld [vmem:[#allocation2 + $0x20] sm:$0xff]
    %v571 = vld [vmem:[#allocation2 + $0x28] sm:$0xff]
    %v572 = vld [vmem:[#allocation2 + $0x30] sm:$0xff]
    %v573 = vld [vmem:[#allocation2 + $0x38] sm:$0xff]
    %v574 = vld [vmem:[#allocation2 + $0x40] sm:$0xff]
    %v575 = vld [vmem:[#allocation2 + $0x48] sm:$0xff]
    %v576 = vld [vmem:[#allocation2 + $0x50] sm:$0xff]
    %v577 = vld [vmem:[#allocation2 + $0x58] sm:$0xff]
    %v578 = vld [vmem:[#allocation2 + $0x60] sm:$0xff]
    %v579 = vld [vmem:[#allocation2 + $0x68] sm:$0xff]
    %v580 = vld [vmem:[#allocation2 + $0x70] sm:$0xff]
    %v581 = vld [vmem:[#allocation2 + $0x78] sm:$0xff]
    %v582 = vld [vmem:[#allocation2 + $0x80] sm:$0xff]
    %v583 = vld [vmem:[#allocation2 + $0x88] sm:$0xff]
    %v584 = vld [vmem:[#allocation2 + $0x90] sm:$0xff]
    %v585 = vld [vmem:[#allocation2 + $0x98] sm:$0xff]
    %v586 = vld [vmem:[#allocation2 + $0xa0] sm:$0xff]
    %v587 = vld [vmem:[#allocation2 + $0xa8] sm:$0xff]
    %v588 = vld [vmem:[#allocation2 + $0xb0] sm:$0xff]
    %v589 = vld [vmem:[#allocation2 + $0xb8] sm:$0xff]
    %v590 = vld [vmem:[#allocation2 + $0xc0] sm:$0xff]
    %v591 = vld [vmem:[#allocation2 + $0xc8] sm:$0xff]
    %v592 = vld [vmem:[#allocation2 + $0xd0] sm:$0xff]
    %v593 = vld [vmem:[#allocation2 + $0xd8] sm:$0xff]
    %v594 = vld [vmem:[#allocation2 + $0xe0] sm:$0xff]
    %v595 = vld [vmem:[#allocation2 + $0xe8] sm:$0xff]
    %v596 = vld [vmem:[#allocation2 + $0xf0] sm:$0xff]
    %v597 = vld [vmem:[#allocation2 + $0xf8] sm:$0xff]
    %v598 = vld [vmem:[#allocation2 + $0x100] sm:$0xff]
    %v599 = vld [vmem:[#allocation2 + $0x108] sm:$0xff]
    %v600 = vld [vmem:[#allocation2 + $0x110] sm:$0xff]
    %v601 = vld [vmem:[#allocation2 + $0x118] sm:$0xff]
    %v602 = vld [vmem:[#allocation2 + $0x120] sm:$0xff]
    %v603 = vld [vmem:[#allocation2 + $0x128] sm:$0xff]
    %v604 = vld [vmem:[#allocation2 + $0x130] sm:$0xff]
    %v605 = vld [vmem:[#allocation2 + $0x138] sm:$0xff]
    %v606 = vld [vmem:[#allocation2 + $0x140] sm:$0xff]
    %v607 = vld [vmem:[#allocation2 + $0x148] sm:$0xff]
    %v608 = vld [vmem:[#allocation2 + $0x150] sm:$0xff]
    %v609 = vld [vmem:[#allocation2 + $0x158] sm:$0xff]
    %v610 = vld [vmem:[#allocation2 + $0x160] sm:$0xff]
    %v611 = vld [vmem:[#allocation2 + $0x168] sm:$0xff]
    %v612 = vld [vmem:[#allocation2 + $0x170] sm:$0xff]
    %v613 = vld [vmem:[#allocation2 + $0x178] sm:$0xff]
    %v614 = vld [vmem:[#allocation2 + $0x180] sm:$0xff]
    %v615 = vld [vmem:[#allocation2 + $0x188] sm:$0xff]
    %v616 = vld [vmem:[#allocation2 + $0x190] sm:$0xff]
    %v617 = vld [vmem:[#allocation2 + $0x198] sm:$0xff]
    %v618 = vld [vmem:[#allocation2 + $0x1a0] sm:$0xff]
    %v619 = vld [vmem:[#allocation2 + $0x1a8] sm:$0xff]
    %v620 = vld [vmem:[#allocation2 + $0x1b0] sm:$0xff]
    %v621 = vld [vmem:[#allocation2 + $0x1b8] sm:$0xff]
    %v622 = vld [vmem:[#allocation2 + $0x1c0] sm:$0xff]
    %v623 = vld [vmem:[#allocation2 + $0x1c8] sm:$0xff]
    %v624 = vld [vmem:[#allocation2 + $0x1d0] sm:$0xff]
    %v625 = vld [vmem:[#allocation2 + $0x1d8] sm:$0xff]
    %v626 = vld [vmem:[#allocation2 + $0x1e0] sm:$0xff]
    %v627 = vld [vmem:[#allocation2 + $0x1e8] sm:$0xff]
    %v628 = vld [vmem:[#allocation2 + $0x1f0] sm:$0xff]
    %v629 = vld [vmem:[#allocation2 + $0x1f8] sm:$0xff]
    %v630 = vld [vmem:[%s2] sm:$0x1]
    %v632 = vperm.slane %v630, 0
    %v634 = vadd.f32 %v566, %v632
    %v635 = vadd.f32 %v567, %v632
    %v636 = vadd.f32 %v568, %v632
    %v637 = vadd.f32 %v569, %v632
    %v638 = vadd.f32 %v570, %v632
    %v639 = vadd.f32 %v571, %v632
    %v640 = vadd.f32 %v572, %v632
    %v641 = vadd.f32 %v573, %v632
    %v642 = vadd.f32 %v574, %v632
    %v643 = vadd.f32 %v575, %v632
    %v644 = vadd.f32 %v576, %v632
    %v645 = vadd.f32 %v577, %v632
    %v646 = vadd.f32 %v578, %v632
    %v647 = vadd.f32 %v579, %v632
    %v648 = vadd.f32 %v580, %v632
    %v649 = vadd.f32 %v581, %v632
    %v650 = vadd.f32 %v582, %v632
    %v651 = vadd.f32 %v583, %v632
    %v652 = vadd.f32 %v584, %v632
    %v653 = vadd.f32 %v585, %v632
    %v654 = vadd.f32 %v586, %v632
    %v655 = vadd.f32 %v587, %v632
    %v656 = vadd.f32 %v588, %v632
    %v657 = vadd.f32 %v589, %v632
    %v658 = vadd.f32 %v590, %v632
    %v659 = vadd.f32 %v591, %v632
    %v660 = vadd.f32 %v592, %v632
    %v661 = vadd.f32 %v593, %v632
    %v662 = vadd.f32 %v594, %v632
    %v663 = vadd.f32 %v595, %v632
    %v664 = vadd.f32 %v596, %v632
    %v665 = vadd.f32 %v597, %v632
    %v666 = vadd.f32 %v598, %v632
    %v667 = vadd.f32 %v599, %v632
    %v668 = vadd.f32 %v600, %v632
    %v669 = vadd.f32 %v601, %v632
    %v670 = vadd.f32 %v602, %v632
    %v671 = vadd.f32 %v603, %v632
    %v672 = vadd.f32 %v604, %v632
    %v673 = vadd.f32 %v605, %v632
    %v674 = vadd.f32 %v606, %v632
    %v675 = vadd.f32 %v607, %v632
    %v676 = vadd.f32 %v608, %v632
    %v677 = vadd.f32 %v609, %v632
    %v678 = vadd.f32 %v610, %v632
    %v679 = vadd.f32 %v611, %v632
    %v680 = vadd.f32 %v612, %v632
    %v681 = vadd.f32 %v613, %v632
    %v682 = vadd.f32 %v614, %v632
    %v683 = vadd.f32 %v615, %v632
    %v684 = vadd.f32 %v616, %v632
    %v685 = vadd.f32 %v617, %v632
    %v686 = vadd.f32 %v618, %v632
    %v687 = vadd.f32 %v619, %v632
    %v688 = vadd.f32 %v620, %v632
    %v689 = vadd.f32 %v621, %v632
    %v690 = vadd.f32 %v622, %v632
    %v691 = vadd.f32 %v623, %v632
    %v692 = vadd.f32 %v624, %v632
    %v693 = vadd.f32 %v625, %v632
    %v694 = vadd.f32 %v626, %v632
    %v695 = vadd.f32 %v627, %v632
    %v696 = vadd.f32 %v628, %v632
    %v697 = vadd.f32 %v629, %v632
    %698 = vst [vmem:[%s3] sm:$0xff] %v634
    %699 = vst [vmem:[%s3 + $0x8] sm:$0xff] %v635
    %700 = vst [vmem:[%s3 + $0x10] sm:$0xff] %v636
    %701 = vst [vmem:[%s3 + $0x18] sm:$0xff] %v637
    %702 = vst [vmem:[%s3 + $0x20] sm:$0xff] %v638
    %703 = vst [vmem:[%s3 + $0x28] sm:$0xff] %v639
    %704 = vst [vmem:[%s3 + $0x30] sm:$0xff] %v640
    %705 = vst [vmem:[%s3 + $0x38] sm:$0xff] %v641
    %706 = vst [vmem:[%s3 + $0x40] sm:$0xff] %v642
    %707 = vst [vmem:[%s3 + $0x48] sm:$0xff] %v643
    %708 = vst [vmem:[%s3 + $0x50] sm:$0xff] %v644
    %709 = vst [vmem:[%s3 + $0x58] sm:$0xff] %v645
    %710 = vst [vmem:[%s3 + $0x60] sm:$0xff] %v646
    %711 = vst [vmem:[%s3 + $0x68] sm:$0xff] %v647
    %712 = vst [vmem:[%s3 + $0x70] sm:$0xff] %v648
    %713 = vst [vmem:[%s3 + $0x78] sm:$0xff] %v649
    %714 = vst [vmem:[%s3 + $0x80] sm:$0xff] %v650
    %715 = vst [vmem:[%s3 + $0x88] sm:$0xff] %v651
    %716 = vst [vmem:[%s3 + $0x90] sm:$0xff] %v652
    %717 = vst [vmem:[%s3 + $0x98] sm:$0xff] %v653
    %718 = vst [vmem:[%s3 + $0xa0] sm:$0xff] %v654
    %719 = vst [vmem:[%s3 + $0xa8] sm:$0xff] %v655
    %720 = vst [vmem:[%s3 + $0xb0] sm:$0xff] %v656
    %721 = vst [vmem:[%s3 + $0xb8] sm:$0xff] %v657
    %722 = vst [vmem:[%s3 + $0xc0] sm:$0xff] %v658
    %723 = vst [vmem:[%s3 + $0xc8] sm:$0xff] %v659
    %724 = vst [vmem:[%s3 + $0xd0] sm:$0xff] %v660
    %725 = vst [vmem:[%s3 + $0xd8] sm:$0xff] %v661
    %726 = vst [vmem:[%s3 + $0xe0] sm:$0xff] %v662
    %727 = vst [vmem:[%s3 + $0xe8] sm:$0xff] %v663
    %728 = vst [vmem:[%s3 + $0xf0] sm:$0xff] %v664
    %729 = vst [vmem:[%s3 + $0xf8] sm:$0xff] %v665
    %730 = vst [vmem:[%s3 + $0x100] sm:$0xff] %v666
    %731 = vst [vmem:[%s3 + $0x108] sm:$0xff] %v667
    %732 = vst [vmem:[%s3 + $0x110] sm:$0xff] %v668
    %733 = vst [vmem:[%s3 + $0x118] sm:$0xff] %v669
    %734 = vst [vmem:[%s3 + $0x120] sm:$0xff] %v670
    %735 = vst [vmem:[%s3 + $0x128] sm:$0xff] %v671
    %736 = vst [vmem:[%s3 + $0x130] sm:$0xff] %v672
    %737 = vst [vmem:[%s3 + $0x138] sm:$0xff] %v673
    %738 = vst [vmem:[%s3 + $0x140] sm:$0xff] %v674
    %739 = vst [vmem:[%s3 + $0x148] sm:$0xff] %v675
    %740 = vst [vmem:[%s3 + $0x150] sm:$0xff] %v676
    %741 = vst [vmem:[%s3 + $0x158] sm:$0xff] %v677
    %742 = vst [vmem:[%s3 + $0x160] sm:$0xff] %v678
    %743 = vst [vmem:[%s3 + $0x168] sm:$0xff] %v679
    %744 = vst [vmem:[%s3 + $0x170] sm:$0xff] %v680
    %745 = vst [vmem:[%s3 + $0x178] sm:$0xff] %v681
    %746 = vst [vmem:[%s3 + $0x180] sm:$0xff] %v682
    %747 = vst [vmem:[%s3 + $0x188] sm:$0xff] %v683
    %748 = vst [vmem:[%s3 + $0x190] sm:$0xff] %v684
    %749 = vst [vmem:[%s3 + $0x198] sm:$0xff] %v685
    %750 = vst [vmem:[%s3 + $0x1a0] sm:$0xff] %v686
    %751 = vst [vmem:[%s3 + $0x1a8] sm:$0xff] %v687
    %752 = vst [vmem:[%s3 + $0x1b0] sm:$0xff] %v688
    %753 = vst [vmem:[%s3 + $0x1b8] sm:$0xff] %v689
    %754 = vst [vmem:[%s3 + $0x1c0] sm:$0xff] %v690
    %755 = vst [vmem:[%s3 + $0x1c8] sm:$0xff] %v691
    %756 = vst [vmem:[%s3 + $0x1d0] sm:$0xff] %v692
    %757 = vst [vmem:[%s3 + $0x1d8] sm:$0xff] %v693
    %758 = vst [vmem:[%s3 + $0x1e0] sm:$0xff] %v694
    %759 = vst [vmem:[%s3 + $0x1e8] sm:$0xff] %v695
    %760 = vst [vmem:[%s3 + $0x1f0] sm:$0xff] %v696
    %761 = vst [vmem:[%s3 + $0x1f8] sm:$0xff] %v697
  $region21: #{column_parallel_conv2d.1} parent=0 // pred_fallthru
    _
  // Predicated region
  $region22: #{column_parallel_conv2d.1} parent=0 // pred_check
    _
  $region23: #{column_parallel_conv2d.1} parent=0 // pred_check_branch
    %763 = sbr.rel (0) target = $region25
  $region24: #{column_parallel_conv2d.1} parent=0 // pred_region
    _
  $region25: #{column_parallel_conv2d.1} parent=0 // pred_fallthru
    _
  // Predicated region
  $region26: #{column_parallel_conv2d.1} parent=0 // pred_check
    _
  $region27: #{column_parallel_conv2d.1} parent=0 // pred_check_branch
    %765 = sbr.rel (0) target = $region29
  $region28: #{column_parallel_conv2d.1} parent=0 // pred_region
    _
  $region29: #{column_parallel_conv2d.1} parent=0 // pred_fallthru
    _

</llo_original>
